<compile_context>
chip_gen: v6e
topology: v6e:2x2x1
jax: 0.10.0
libtpu: 0.0.40
codegen_flags: <defaults>
</compile_context>

<pallas_src>
import functools

import jax
import jax.numpy as jnp
from jax import lax
from jax.experimental import pallas as pl
from jax.experimental.pallas import tpu as pltpu

BN_EPS = 1e-5


def _round_up(x, m):
    return ((x + m - 1) // m) * m


def _lenet5_block_kernel(n_rows, patches_ref, w_ref, gamma_ref, beta_ref,
                         out_ref, sum_ref, ssq_ref, scale_ref, shift_ref):
    """grid = (phase, m_tile): phase 0 = stats accumulation, phase 1 = normalize."""
    p = pl.program_id(0)   # phase
    i = pl.program_id(1)   # M-tile index

    # Convolution as an MXU matmul on the im2col tile.  Zero-padded K columns
    # and zero-padded rows contribute exact zeros (no bias is added).
    y = jnp.dot(patches_ref[...], w_ref[...], preferred_element_type=jnp.float32)

    @pl.when(p == 0)
    def _stats_phase():
        @pl.when(i == 0)
        def _init():
            sum_ref[...] = jnp.zeros_like(sum_ref)
            ssq_ref[...] = jnp.zeros_like(ssq_ref)
        sum_ref[...] += jnp.sum(y, axis=0, keepdims=True)
        ssq_ref[...] += jnp.sum(y * y, axis=0, keepdims=True)
        # No out_ref write: the output index_map pins phase 0 to block 0, so
        # nothing is written back to HBM until phase 1 produces real data.

    @pl.when(p == 1)
    def _normalize_phase():
        @pl.when(i == 0)
        def _finalize_stats():
            inv_m = 1.0 / n_rows                       # true row count (excl. padding)
            mean = sum_ref[...] * inv_m
            var = jnp.maximum(ssq_ref[...] * inv_m - mean * mean, 0.0)
            scale = gamma_ref[...] * lax.rsqrt(var + BN_EPS)   # EUP rsqrt
            scale_ref[...] = scale
            shift_ref[...] = beta_ref[...] - mean * scale
        # Single fused elementwise pass: affine + ReLU, lane-dense (C_pad=128).
        out_ref[...] = jnp.maximum(y * scale_ref[...] + shift_ref[...], 0.0)


def lenet5_block(x_nchw, w_oihw, bias, gamma, beta, *, stride, padding, tm=1024):
    """Conv2d(stride, padding) -> BatchNorm2d (batch stats) -> ReLU.  NCHW in/out.

    `bias` is accepted for API parity with nn.Conv2d but intentionally not
    added: training-mode BatchNorm's mean subtraction cancels it exactly.
    """
    del bias
    N, C_in, H, W = x_nchw.shape
    C_out, _, KH, KW = w_oihw.shape

    x = jnp.transpose(x_nchw, (0, 2, 3, 1)).astype(jnp.float32)  # NHWC
    x_pad = jnp.pad(x, ((0, 0), (padding, padding), (padding, padding), (0, 0)))

    OH = (H + 2 * padding - KH) // stride + 1
    OW = (W + 2 * padding - KW) // stride + 1

    # im2col unfold (XLA glue).
    # TODO(synk): internalize the unfold (KH*KW shifted-slice matmuls on a
    # VMEM-resident NHWC input) to avoid the ~KH*KW x HBM expansion.
    kh_slices = []
    for kh in range(KH):
        kw_slices = []
        for kw in range(KW):
            sl = x_pad[:, kh:kh + stride * OH:stride, kw:kw + stride * OW:stride, :]
            kw_slices.append(sl)
        kh_slices.append(jnp.stack(kw_slices, axis=3))            # (N,OH,OW,KW,C)
    patches = jnp.stack(kh_slices, axis=3)                        # (N,OH,OW,KH,KW,C)

    M = N * OH * OW
    K = KH * KW * C_in
    patches = patches.reshape(M, K)

    # Lane-dense padding: K and C_out to multiples of 128; M tiled by `tm`.
    K_pad = _round_up(K, 128)
    C_pad = _round_up(C_out, 128)
    tm = _round_up(max(8, min(tm, _round_up(M, 8))), 8)
    M_pad = _round_up(M, tm)
    n_tiles = M_pad // tm

    patches = jnp.pad(patches, ((0, M_pad - M), (0, K_pad - K)))

    # weight (O,I,KH,KW) -> (KH,KW,I,O) -> (K, C_out), matching patch ordering.
    w_mat = jnp.transpose(w_oihw, (2, 3, 1, 0)).reshape(K, C_out).astype(jnp.float32)
    w_mat = jnp.pad(w_mat, ((0, K_pad - K), (0, C_pad - C_out)))
    g2 = jnp.pad(gamma.reshape(1, C_out).astype(jnp.float32),
                 ((0, 0), (0, C_pad - C_out)))
    b2 = jnp.pad(beta.reshape(1, C_out).astype(jnp.float32),
                 ((0, 0), (0, C_pad - C_out)))

    # Explicit VMEM budget (double-buffered patch + output tiles, resident
    # weights/scalars), capped at v7x's 64 MiB physical VMEM.
    tile_bytes = 4 * tm * (K_pad + C_pad)
    resident_bytes = 4 * (K_pad * C_pad + 6 * C_pad)
    vmem_limit = int(min(64 << 20,
                         max(32 << 20, 4 * tile_bytes + resident_bytes + (4 << 20))))

    kernel = functools.partial(_lenet5_block_kernel, float(M))

    out_flat = pl.pallas_call(
        kernel,
        out_shape=jax.ShapeDtypeStruct((M_pad, C_pad), jnp.float32),
        grid_spec=pltpu.PrefetchScalarGridSpec(
            num_scalar_prefetch=0,
            grid=(2, n_tiles),                      # (phase, M tile)
            in_specs=[
                pl.BlockSpec((tm, K_pad), lambda p, i: (i, 0)),
                pl.BlockSpec((K_pad, C_pad), lambda p, i: (0, 0)),
                pl.BlockSpec((1, C_pad), lambda p, i: (0, 0)),
                pl.BlockSpec((1, C_pad), lambda p, i: (0, 0)),
            ],
            # Phase 0 pins the output to block 0 (no writeback of undefined
            # data); phase 1 walks the real tiles.
            out_specs=pl.BlockSpec((tm, C_pad), lambda p, i: (i * p, 0)),
            scratch_shapes=[pltpu.VMEM((1, C_pad), jnp.float32) for _ in range(4)],
        ),
        compiler_params=pltpu.CompilerParams(
            # Both axes carry sequential dependencies (stats accumulation, then
            # a finalize step) -> "arbitrary".
            # TODO(synk): shard M across v7x's 2 TCs with a cross-core stats combine.
            dimension_semantics=("arbitrary", "arbitrary"),
            vmem_limit_bytes=vmem_limit,
        ),
    )(patches, w_mat, g2, b2)

    out = out_flat[:M, :C_out]
    return jnp.transpose(out.reshape(N, OH, OW, C_out), (0, 3, 1, 2))


def _reference(x, w, b, gamma, beta, *, stride, padding):
    """Pure-JAX reference identical to the PyTorch forward (training-mode BN)."""
    y = lax.conv_general_dilated(
        x.astype(jnp.float32), w.astype(jnp.float32),
        window_strides=(stride, stride),
        padding=[(padding, padding), (padding, padding)],
        dimension_numbers=("NCHW", "OIHW", "NCHW"))
    y = y + b.reshape(1, -1, 1, 1)
    mean = jnp.mean(y, axis=(0, 2, 3), keepdims=True)
    var = jnp.mean((y - mean) ** 2, axis=(0, 2, 3), keepdims=True)
    y = (y - mean) / jnp.sqrt(var + BN_EPS)
    y = y * gamma.reshape(1, -1, 1, 1) + beta.reshape(1, -1, 1, 1)
    return jnp.maximum(y, 0.0)


if __name__ == "__main__":
    # Small shapes consistent with a LeNet-style block.
    N, C_in, H, W = 2, 4, 16, 16
    C_out, kernel_size, stride, padding = 8, 5, 1, 2

    key = jax.random.PRNGKey(0)
    kx, kw, kb = jax.random.split(key, 3)

    x = jax.random.normal(kx, (N, C_in, H, W), dtype=jnp.float32)
    w = jax.random.normal(kw, (C_out, C_in, kernel_size, kernel_size),
                          dtype=jnp.float32) * 0.1
    b = jax.random.normal(kb, (C_out,), dtype=jnp.float32) * 0.1
    gamma = jnp.ones((C_out,), dtype=jnp.float32)   # BatchNorm2d default init
    beta = jnp.zeros((C_out,), dtype=jnp.float32)

    # tm=128 exercises a multi-tile grid (M = 2*16*16 = 512 -> 4 tiles/phase).
    out = lenet5_block(x, w, b, gamma, beta, stride=stride, padding=padding, tm=128)
    out = jax.block_until_ready(out)

    ref = _reference(x, w, b, gamma, beta, stride=stride, padding=padding)
    assert out.shape == (N, C_out, H, W), out.shape
    assert jnp.allclose(out, ref, atol=1e-4, rtol=1e-4), \
        float(jnp.max(jnp.abs(out - ref)))

    print("KERNEL_OK")
</pallas_src>

<mosaic_0001>
module attributes {stable_mosaic.version = 11 : i64} {
  func.func @_lenet5_block_kernel(%arg0: i32, %arg1: i32, %arg2: memref<128x128xf32, #tpu.memory_space<vmem>>, %arg3: memref<128x128xf32, #tpu.memory_space<vmem>>, %arg4: memref<1x128xf32, #tpu.memory_space<vmem>>, %arg5: memref<1x128xf32, #tpu.memory_space<vmem>>, %arg6: memref<128x128xf32, #tpu.memory_space<vmem>>, %arg7: memref<1x128xf32, #tpu.memory_space<vmem>>, %arg8: memref<1x128xf32, #tpu.memory_space<vmem>>, %arg9: memref<1x128xf32, #tpu.memory_space<vmem>>, %arg10: memref<1x128xf32, #tpu.memory_space<vmem>>) attributes {dimension_semantics = [#tpu.dimension_semantics<arbitrary>, #tpu.dimension_semantics<arbitrary>], iteration_bounds = array<i64: 2, 4>, scalar_prefetch = 0 : i64, scratch_operands = 4 : i64, tpu.core_type = #tpu.core_type<tc>, window_params = [{transform_indices = @transform_0, window_bounds = array<i64: 128, 128>}, {pipeline_mode = #tpu.pipeline_mode<synchronous>, transform_indices = @transform_1, window_bounds = array<i64: 128, 128>}, {pipeline_mode = #tpu.pipeline_mode<synchronous>, transform_indices = @transform_2, window_bounds = array<i64: 1, 128>}, {pipeline_mode = #tpu.pipeline_mode<synchronous>, transform_indices = @transform_3, window_bounds = array<i64: 1, 128>}, {transform_indices = @transform_4, window_bounds = array<i64: 128, 128>}]} {
    %c0 = arith.constant 0 : index
    %c0_0 = arith.constant 0 : index
    %0 = vector.load %arg2[%c0, %c0_0] : memref<128x128xf32, #tpu.memory_space<vmem>>, vector<128x128xf32>
    %c0_1 = arith.constant 0 : index
    %c0_2 = arith.constant 0 : index
    %1 = vector.load %arg3[%c0_1, %c0_2] : memref<128x128xf32, #tpu.memory_space<vmem>>, vector<128x128xf32>
    %cst = arith.constant dense<0.000000e+00> : vector<128x128xf32>
    %2 = tpu.matmul %0, %1, %cst {dimension_numbers = #tpu.dot_dimension_numbers<[1], [0], [0], [1], [0, 0, 1, 1], [], []>} : vector<128x128xf32>, vector<128x128xf32>, vector<128x128xf32> -> vector<128x128xf32>
    %c0_i32 = arith.constant 0 : i32
    %3 = arith.cmpi eq, %arg0, %c0_i32 : i32
    %4 = arith.extui %3 : i1 to i32
    %c0_i32_3 = arith.constant 0 : i32
    %5 = arith.cmpi ne, %4, %c0_i32_3 : i32
    scf.if %5 {
      %c0_i32_5 = arith.constant 0 : i32
      %9 = arith.cmpi eq, %arg1, %c0_i32_5 : i32
      %10 = arith.extui %9 : i1 to i32
      %c0_i32_6 = arith.constant 0 : i32
      %11 = arith.cmpi ne, %10, %c0_i32_6 : i32
      scf.if %11 {
        %cst_17 = arith.constant 0.000000e+00 : f32
        %23 = vector.broadcast %cst_17 : f32 to vector<1x128xf32>
        %c0_18 = arith.constant 0 : index
        %c0_19 = arith.constant 0 : index
        %24 = vector.load %arg7[%c0_18, %c0_19] : memref<1x128xf32, #tpu.memory_space<vmem>>, vector<1x128xf32>
        tpu.vector_store %arg7[%c0_18, %c0_19], %23 {strides = array<i32>} : memref<1x128xf32, #tpu.memory_space<vmem>>, vector<1x128xf32>,
        %cst_20 = arith.constant 0.000000e+00 : f32
        %25 = vector.broadcast %cst_20 : f32 to vector<1x128xf32>
        %c0_21 = arith.constant 0 : index
        %c0_22 = arith.constant 0 : index
        %26 = vector.load %arg8[%c0_21, %c0_22] : memref<1x128xf32, #tpu.memory_space<vmem>>, vector<1x128xf32>
        tpu.vector_store %arg8[%c0_21, %c0_22], %25 {strides = array<i32>} : memref<1x128xf32, #tpu.memory_space<vmem>>, vector<1x128xf32>,
      } else {
      }
      %c0_7 = arith.constant 0 : index
      %c0_8 = arith.constant 0 : index
      %12 = vector.load %arg7[%c0_7, %c0_8] : memref<1x128xf32, #tpu.memory_space<vmem>>, vector<1x128xf32>
      %cst_9 = arith.constant dense<0.000000e+00> : vector<128xf32>
      %13 = vector.multi_reduction <add>, %2, %cst_9 [0] : vector<128x128xf32> to vector<128xf32>
      %14 = vector.shape_cast %13 : vector<128xf32> to vector<1x128xf32>
      %15 = arith.addf %12, %14 : vector<1x128xf32>
      %c0_10 = arith.constant 0 : index
      %c0_11 = arith.constant 0 : index
      %16 = vector.load %arg7[%c0_10, %c0_11] : memref<1x128xf32, #tpu.memory_space<vmem>>, vector<1x128xf32>
      tpu.vector_store %arg7[%c0_10, %c0_11], %15 {strides = array<i32>} : memref<1x128xf32, #tpu.memory_space<vmem>>, vector<1x128xf32>,
      %c0_12 = arith.constant 0 : index
      %c0_13 = arith.constant 0 : index
      %17 = vector.load %arg8[%c0_12, %c0_13] : memref<1x128xf32, #tpu.memory_space<vmem>>, vector<1x128xf32>
      %18 = arith.mulf %2, %2 : vector<128x128xf32>
      %cst_14 = arith.constant dense<0.000000e+00> : vector<128xf32>
      %19 = vector.multi_reduction <add>, %18, %cst_14 [0] : vector<128x128xf32> to vector<128xf32>
      %20 = vector.shape_cast %19 : vector<128xf32> to vector<1x128xf32>
      %21 = arith.addf %17, %20 : vector<1x128xf32>
      %c0_15 = arith.constant 0 : index
      %c0_16 = arith.constant 0 : index
      %22 = vector.load %arg8[%c0_15, %c0_16] : memref<1x128xf32, #tpu.memory_space<vmem>>, vector<1x128xf32>
      tpu.vector_store %arg8[%c0_15, %c0_16], %21 {strides = array<i32>} : memref<1x128xf32, #tpu.memory_space<vmem>>, vector<1x128xf32>,
    } else {
    }
    %c1_i32 = arith.constant 1 : i32
    %6 = arith.cmpi eq, %arg0, %c1_i32 : i32
    %7 = arith.extui %6 : i1 to i32
    %c0_i32_4 = arith.constant 0 : i32
    %8 = arith.cmpi ne, %7, %c0_i32_4 : i32
    scf.if %8 {
      %c0_i32_5 = arith.constant 0 : i32
      %9 = arith.cmpi eq, %arg1, %c0_i32_5 : i32
      %10 = arith.extui %9 : i1 to i32
      %c0_i32_6 = arith.constant 0 : i32
      %11 = arith.cmpi ne, %10, %c0_i32_6 : i32
      scf.if %11 {
        %c0_14 = arith.constant 0 : index
        %c0_15 = arith.constant 0 : index
        %21 = vector.load %arg7[%c0_14, %c0_15] : memref<1x128xf32, #tpu.memory_space<vmem>>, vector<1x128xf32>
        %cst_16 = arith.constant 0.001953125 : f32
        %22 = vector.broadcast %cst_16 : f32 to vector<1x128xf32>
        %23 = arith.mulf %21, %22 : vector<1x128xf32>
        %c0_17 = arith.constant 0 : index
        %c0_18 = arith.constant 0 : index
        %24 = vector.load %arg8[%c0_17, %c0_18] : memref<1x128xf32, #tpu.memory_space<vmem>>, vector<1x128xf32>
        %cst_19 = arith.constant 0.001953125 : f32
        %25 = vector.broadcast %cst_19 : f32 to vector<1x128xf32>
        %26 = arith.mulf %24, %25 : vector<1x128xf32>
        %27 = arith.mulf %23, %23 : vector<1x128xf32>
        %28 = arith.subf %26, %27 : vector<1x128xf32>
        %cst_20 = arith.constant 0.000000e+00 : f32
        %29 = vector.broadcast %cst_20 : f32 to vector<1x128xf32>
        %30 = arith.maximumf %28, %29 : vector<1x128xf32>
        %c0_21 = arith.constant 0 : index
        %c0_22 = arith.constant 0 : index
        %31 = vector.load %arg4[%c0_21, %c0_22] : memref<1x128xf32, #tpu.memory_space<vmem>>, vector<1x128xf32>
        %cst_23 = arith.constant 9.99999974E-6 : f32
        %32 = vector.broadcast %cst_23 : f32 to vector<1x128xf32>
        %33 = arith.addf %30, %32 : vector<1x128xf32>
        %34 = math.rsqrt %33 : vector<1x128xf32>
        %35 = arith.mulf %31, %34 : vector<1x128xf32>
        %c0_24 = arith.constant 0 : index
        %c0_25 = arith.constant 0 : index
        %36 = vector.load %arg9[%c0_24, %c0_25] : memref<1x128xf32, #tpu.memory_space<vmem>>, vector<1x128xf32>
        tpu.vector_store %arg9[%c0_24, %c0_25], %35 {strides = array<i32>} : memref<1x128xf32, #tpu.memory_space<vmem>>, vector<1x128xf32>,
        %c0_26 = arith.constant 0 : index
        %c0_27 = arith.constant 0 : index
        %37 = vector.load %arg5[%c0_26, %c0_27] : memref<1x128xf32, #tpu.memory_space<vmem>>, vector<1x128xf32>
        %38 = arith.mulf %23, %35 : vector<1x128xf32>
        %39 = arith.subf %37, %38 : vector<1x128xf32>
        %c0_28 = arith.constant 0 : index
        %c0_29 = arith.constant 0 : index
        %40 = vector.load %arg10[%c0_28, %c0_29] : memref<1x128xf32, #tpu.memory_space<vmem>>, vector<1x128xf32>
        tpu.vector_store %arg10[%c0_28, %c0_29], %39 {strides = array<i32>} : memref<1x128xf32, #tpu.memory_space<vmem>>, vector<1x128xf32>,
      } else {
      }
      %c0_7 = arith.constant 0 : index
      %c0_8 = arith.constant 0 : index
      %12 = vector.load %arg9[%c0_7, %c0_8] : memref<1x128xf32, #tpu.memory_space<vmem>>, vector<1x128xf32>
      %13 = vector.broadcast %12 : vector<1x128xf32> to vector<128x128xf32>
      %14 = arith.mulf %2, %13 : vector<128x128xf32>
      %c0_9 = arith.constant 0 : index
      %c0_10 = arith.constant 0 : index
      %15 = vector.load %arg10[%c0_9, %c0_10] : memref<1x128xf32, #tpu.memory_space<vmem>>, vector<1x128xf32>
      %16 = vector.broadcast %15 : vector<1x128xf32> to vector<128x128xf32>
      %17 = arith.addf %14, %16 : vector<128x128xf32>
      %cst_11 = arith.constant 0.000000e+00 : f32
      %18 = vector.broadcast %cst_11 : f32 to vector<128x128xf32>
      %19 = arith.maximumf %17, %18 : vector<128x128xf32>
      %c0_12 = arith.constant 0 : index
      %c0_13 = arith.constant 0 : index
      %20 = vector.load %arg6[%c0_12, %c0_13] : memref<128x128xf32, #tpu.memory_space<vmem>>, vector<128x128xf32>
      tpu.vector_store %arg6[%c0_12, %c0_13], %19 {strides = array<i32>} : memref<128x128xf32, #tpu.memory_space<vmem>>, vector<128x128xf32>,
    } else {
    }
    return
  }
  func.func @transform_0(%arg0: i32, %arg1: i32) -> (i32, i32) {
    %c0_i32 = arith.constant 0 : i32
    %c0_i32_0 = arith.constant 0 : i32
    return %arg1, %c0_i32 : i32, i32
  }
  func.func @transform_1(%arg0: i32, %arg1: i32) -> (i32, i32) {
    %c0_i32 = arith.constant 0 : i32
    %c0_i32_0 = arith.constant 0 : i32
    %c0_i32_1 = arith.constant 0 : i32
    return %c0_i32, %c0_i32_0 : i32, i32
  }
  func.func @transform_2(%arg0: i32, %arg1: i32) -> (i32, i32) {
    %c0_i32 = arith.constant 0 : i32
    %c0_i32_0 = arith.constant 0 : i32
    %c0_i32_1 = arith.constant 0 : i32
    return %c0_i32, %c0_i32_0 : i32, i32
  }
  func.func @transform_3(%arg0: i32, %arg1: i32) -> (i32, i32) {
    %c0_i32 = arith.constant 0 : i32
    %c0_i32_0 = arith.constant 0 : i32
    %c0_i32_1 = arith.constant 0 : i32
    return %c0_i32, %c0_i32_0 : i32, i32
  }
  func.func @transform_4(%arg0: i32, %arg1: i32) -> (i32, i32) {
    %0 = arith.muli %arg1, %arg0 : i32
    %c0_i32 = arith.constant 0 : i32
    %c0_i32_0 = arith.constant 0 : i32
    return %0, %c0_i32 : i32, i32
  }
}

</mosaic_0001>

<llo_original>
// kernel: tpu_custom_call.1
$region0: #{tpu_custom_call.1}
  #allocation0 [shape = 'u32[]', space=smem, size = 0x4, offset = 0x4, fixed_abs, tag = 'smem constant byte address 0x4 - core index']
  #allocation1 [shape = 'u32[144,128]{1,0:T(1,128)}', space=vmem, size = 0x12000, scoped, tag = 'internal scratch']
  #allocation2 [shape = 'f32[1,128]{1,0:T(1,128)}', space=vmem, size = 0x200, scoped, tag = 'scratch operand']
  #allocation3 [shape = 'f32[1,128]{1,0:T(1,128)}', space=vmem, size = 0x200, scoped, tag = 'scratch operand']
  #allocation4 [shape = 'f32[1,128]{1,0:T(1,128)}', space=vmem, size = 0x200, scoped, tag = 'scratch operand']
  #allocation5 [shape = 'f32[1,128]{1,0:T(1,128)}', space=vmem, size = 0x200, scoped, tag = 'scratch operand']
  %s0 = inlined_call_operand.hbm [shape: f32[512,128], index: 0, kind: input, shape index: {}]
  %s1 = inlined_call_operand.hbm [shape: f32[128,128], index: 1, kind: input, shape index: {}]
  %s2 = inlined_call_operand.vmem [shape: f32[1,128], index: 2, kind: input, shape index: {}]
  %s3 = inlined_call_operand.vmem [shape: f32[1,128], index: 3, kind: input, shape index: {}]
  %s4 = inlined_call_operand.hbm [shape: f32[512,128], index: 4, kind: output, shape index: {}]
  %s5 = sld [smem:[#allocation0]]
  $region73: #{tpu_custom_call.1} parent=0
    _
  %s7 = ssub.s32 1, %s5
  %s8 = scalar_select 0, %s7, %s5
  $region1: #{tpu_custom_call.1} parent=0
    #allocation6 [shape = 'u8[131072]{0}', space=vmem, size = 0x20000, scoped, tag = 'input window, operand 0']
    #allocation7 [shape = 's32[2]{0}', space=sflag, size = 0x8, scoped, tag = 'scoped memory for tpu_custom_call.1']
    #allocation8 [shape = 's32[2]{0}', space=sflag, size = 0x8, scoped, tag = 'scoped memory for tpu_custom_call.1']
    #allocation9 [shape = 'u8[65536]{0}', space=vmem, size = 0x10000, scoped, tag = 'input window, operand 1, single buffered']
    #allocation10 [shape = 's32[1]{0}', space=sflag, size = 0x4, scoped, tag = 'scoped memory for tpu_custom_call.1']
    #allocation11 [shape = 'u8[131072]{0}', space=vmem, size = 0x20000, scoped, tag = 'output window, operand 0']
    %9 = vsyncpa [#allocation7], 0
    %s10 = scalar_lea.sflag [#allocation7], 1
    %11 = vsyncpa %s10, 0
    %12 = vsyncpa [#allocation10], 0
    %13 = vsyncpa [#allocation8], 0
    %s14 = scalar_lea.sflag [#allocation8], 1
    %15 = vsyncpa %s14, 0
    loop: start=0, step=1, limit=10
    $region2: #{tpu_custom_call.1} parent=1 // loop_pre_header
      _
    $region3: #{tpu_custom_call.1} parent=1 // loop_header
      %s17 = sphi 0, %s21
      %p18 = scmp.ge.s32.totalorder %s17, 10
      %s24 = sphi 0, %s36
      %s25 = sphi 0, %s32
      %s26 = sphi 0, %s24
      %s27 = sphi 0, %s25
      %s28 = sphi 0, %s26
      %s29 = sphi 0, %s27
      %s39 = sphi 0, %s41
      %s42 = sphi 0, %s39
      %s43 = sphi 0, %s42
      %s59 = sphi 0, %s43
      %s63 = sphi 0, %s63
      %s65 = sphi 0, %s63
      %s66 = sphi 0, %s65
      %s80 = sphi 0, %s66
      %s84 = sphi 0, %s84
      %s86 = sphi 0, %s84
      %s87 = sphi 0, %s86
      %s101 = sphi 0, %s87
      %s105 = sphi 0, %s105
      %s107 = sphi 0, %s105
      %s108 = sphi 0, %s107
      %s122 = sphi 0, %s108
      %s130 = sphi 0, %s132
      %s133 = sphi 0, %s130
      %s134 = sphi 0, %s133
      %s150 = sphi 0, %s134
    $region4: #{tpu_custom_call.1} parent=1 // loop_header_branch
      %20 = sbr.rel (%p18) target = $region8
    $region5: #{tpu_custom_call.1} parent=1 // loop_body
      %s22 = ssub.s32 %s17, 1
      %s23 = ssub.s32 %s17, 2
      %s30 = sadd.s32 1, %s25
      %p31 = scmp.ge.s32.totalorder %s30, 4
      %s32 = scalar_select %p31, 0, %s30
      %s33 = sadd.s32 1, %s24
      %s34 = scalar_select %p31, %s33, %s24
      %p35 = scmp.ge.s32.totalorder %s34, 2
      %s36 = scalar_select %p35, 0, %s34
      %s37 = ssub.s32 %s25, %s32
      %p38 = scmp.eq.s32.totalorder %s37, 0
      %s40 = sadd.s32 %s39, 1
      %s41 = scalar_select %p38, %s39, %s40
      %p44 = pneg %p38
      %p45 = scmp.eq.s32.totalorder %s17, 7
      %p46 = por %p44, %p45
      %p47 = scmp.ne.s32.totalorder %s39, %s42
      %p48 = scmp.eq.s32.totalorder %s17, 0
      %p49 = por %p47, %p48
      %p50 = scmp.ne.s32.totalorder %s39, %s42
      %p51 = scmp.eq.s32.totalorder %s22, 7
      %p52 = por %p50, %p51
      %p53 = scmp.ne.s32.totalorder %s42, %s43
      %p54 = scmp.eq.s32.totalorder %s22, 0
      %p55 = por %p53, %p54
      %p56 = scmp.ne.s32.totalorder %s42, %s43
      %p57 = scmp.eq.s32.totalorder %s23, 7
      %p58 = por %p56, %p57
      %p60 = scmp.ne.s32.totalorder %s43, %s59
      %p61 = scmp.eq.s32.totalorder %s23, 0
      %p62 = por %p60, %p61
      %s64 = sadd.s32 %s63, 1
      %p67 = scmp.eq.s32.totalorder %s17, 7
      %p68 = scmp.ne.s32.totalorder %s63, %s65
      %p69 = scmp.eq.s32.totalorder %s17, 0
      %p70 = por %p68, %p69
      %p71 = scmp.ne.s32.totalorder %s63, %s65
      %p72 = scmp.eq.s32.totalorder %s22, 7
      %p73 = por %p71, %p72
      %p74 = scmp.ne.s32.totalorder %s65, %s66
      %p75 = scmp.eq.s32.totalorder %s22, 0
      %p76 = por %p74, %p75
      %p77 = scmp.ne.s32.totalorder %s65, %s66
      %p78 = scmp.eq.s32.totalorder %s23, 7
      %p79 = por %p77, %p78
      %p81 = scmp.ne.s32.totalorder %s66, %s80
      %p82 = scmp.eq.s32.totalorder %s23, 0
      %p83 = por %p81, %p82
      %s85 = sadd.s32 %s84, 1
      %p88 = scmp.eq.s32.totalorder %s17, 7
      %p89 = scmp.ne.s32.totalorder %s84, %s86
      %p90 = scmp.eq.s32.totalorder %s17, 0
      %p91 = por %p89, %p90
      %p92 = scmp.ne.s32.totalorder %s84, %s86
      %p93 = scmp.eq.s32.totalorder %s22, 7
      %p94 = por %p92, %p93
      %p95 = scmp.ne.s32.totalorder %s86, %s87
      %p96 = scmp.eq.s32.totalorder %s22, 0
      %p97 = por %p95, %p96
      %p98 = scmp.ne.s32.totalorder %s86, %s87
      %p99 = scmp.eq.s32.totalorder %s23, 7
      %p100 = por %p98, %p99
      %p102 = scmp.ne.s32.totalorder %s87, %s101
      %p103 = scmp.eq.s32.totalorder %s23, 0
      %p104 = por %p102, %p103
      %s106 = sadd.s32 %s105, 1
      %p109 = scmp.eq.s32.totalorder %s17, 7
      %p110 = scmp.ne.s32.totalorder %s105, %s107
      %p111 = scmp.eq.s32.totalorder %s17, 0
      %p112 = por %p110, %p111
      %p113 = scmp.ne.s32.totalorder %s105, %s107
      %p114 = scmp.eq.s32.totalorder %s22, 7
      %p115 = por %p113, %p114
      %p116 = scmp.ne.s32.totalorder %s107, %s108
      %p117 = scmp.eq.s32.totalorder %s22, 0
      %p118 = por %p116, %p117
      %p119 = scmp.ne.s32.totalorder %s107, %s108
      %p120 = scmp.eq.s32.totalorder %s23, 7
      %p121 = por %p119, %p120
      %p123 = scmp.ne.s32.totalorder %s108, %s122
      %p124 = scmp.eq.s32.totalorder %s23, 0
      %p125 = por %p123, %p124
      %s126 = smul.u32 %s25, %s24
      %s127 = smul.u32 %s32, %s36
      %s128 = ssub.s32 %s126, %s127
      %p129 = scmp.eq.s32.totalorder %s128, 0
      %s131 = sadd.s32 %s130, 1
      %s132 = scalar_select %p129, %s130, %s131
      %p135 = pneg %p129
      %p136 = scmp.eq.s32.totalorder %s17, 7
      %p137 = por %p135, %p136
      %p138 = scmp.ne.s32.totalorder %s130, %s133
      %p139 = scmp.eq.s32.totalorder %s17, 0
      %p140 = por %p138, %p139
      %p141 = scmp.ne.s32.totalorder %s130, %s133
      %p142 = scmp.eq.s32.totalorder %s22, 7
      %p143 = por %p141, %p142
      %p144 = scmp.ne.s32.totalorder %s133, %s134
      %p145 = scmp.eq.s32.totalorder %s22, 0
      %p146 = por %p144, %p145
      %p147 = scmp.ne.s32.totalorder %s133, %s134
      %p148 = scmp.eq.s32.totalorder %s23, 7
      %p149 = por %p147, %p148
      %p151 = scmp.ne.s32.totalorder %s134, %s150
      %p152 = scmp.eq.s32.totalorder %s23, 0
      %p153 = por %p151, %p152
      %p154 = scmp.le.s32.totalorder 1, %s17
      %p155 = scmp.lt.s32.totalorder %s17, 9
      %p156 = pnand %p154, %p155
      %p157 = pneg %p156
      // Predicated region
      $region9: #{tpu_custom_call.1} parent=5 // pred_check
        _
      $region10: #{tpu_custom_call.1} parent=5 // pred_check_branch
        %159 = sbr.rel (%p156) target = $region12
      $region11: #{tpu_custom_call.1} parent=5 // pred_region
        %s160 = ssub.s32 %s17, 1
        // Predicated region
        $region13: #{tpu_custom_call.1} parent=11 // pred_check
          %p161 = pneg %p76
        $region14: #{tpu_custom_call.1} parent=11 // pred_check_branch
          %163 = sbr.rel (%p161) target = $region16
        $region15: #{tpu_custom_call.1} parent=11 // pred_region
          %s165 = ssub.s32 2048, 2048
          %166 = vsyncadd [#allocation10], %s165
          %s167 = sshll.u32 [#allocation9], 4
          %s168 = int_to_ptr.vmem [resolvable:$true] %s167
          %173 = dma.hbm_to_vmem [thread:$0]  %s1, 2048, %s168, [#allocation10], 128, 128, 8
        $region16: #{tpu_custom_call.1} parent=11 // pred_fallthru
          _
        // Predicated region
        $region17: #{tpu_custom_call.1} parent=11 // pred_check
          %p174 = pneg %p97
        $region18: #{tpu_custom_call.1} parent=11 // pred_check_branch
          %176 = sbr.rel (%p174) target = $region20
        $region19: #{tpu_custom_call.1} parent=11 // pred_region
          _
        $region20: #{tpu_custom_call.1} parent=11 // pred_fallthru
          _
        // Predicated region
        $region21: #{tpu_custom_call.1} parent=11 // pred_check
          %p177 = pneg %p118
        $region22: #{tpu_custom_call.1} parent=11 // pred_check_branch
          %179 = sbr.rel (%p177) target = $region24
        $region23: #{tpu_custom_call.1} parent=11 // pred_region
          _
        $region24: #{tpu_custom_call.1} parent=11 // pred_fallthru
          _
      $region12: #{tpu_custom_call.1} parent=5 // pred_fallthru
        _
      %p180 = scmp.lt.s32.totalorder %s17, 8
      // Predicated region
      $region25: #{tpu_custom_call.1} parent=5 // pred_check
        %p181 = pneg %p180
      $region26: #{tpu_custom_call.1} parent=5 // pred_check_branch
        %183 = sbr.rel (%p181) target = $region28
      $region27: #{tpu_custom_call.1} parent=5 // pred_region
        // Predicated region
        $region29: #{tpu_custom_call.1} parent=27 // pred_check
          %p184 = pneg %p49
        $region30: #{tpu_custom_call.1} parent=27 // pred_check_branch
          %186 = sbr.rel (%p184) target = $region32
        $region31: #{tpu_custom_call.1} parent=27 // pred_region
          %s187 = sand.u32 %s39, 1
          %s188 = scalar_lea.sflag [#allocation7], %s187
          %s189 = sand.u32 %s39, 1
          %s190 = smul.addr %s189, 128
          %s191 = scalar_lea.vmem [#allocation6], %s190
          %s192 = smul.u32 16, %s25
          %s194 = ssub.s32 2048, 2048
          %195 = vsyncadd %s188, %s194
          %s196 = smul.addr %s192, 128
          %s197 = scalar_lea.hbm %s0, %s196
          %s198 = sshll.u32 %s191, 4
          %s199 = int_to_ptr.vmem [resolvable:$true] %s198
          %204 = dma.hbm_to_vmem [thread:$0]  %s197, 2048, %s199, %s188, 128, 128, 8
        $region32: #{tpu_custom_call.1} parent=27 // pred_fallthru
          _
      $region28: #{tpu_custom_call.1} parent=5 // pred_fallthru
        _
      %p205 = scmp.le.s32.totalorder 1, %s17
      %p206 = scmp.lt.s32.totalorder %s17, 9
      %p207 = pnand %p205, %p206
      %p208 = pneg %p207
      // Predicated region
      $region33: #{tpu_custom_call.1} parent=5 // pred_check
        _
      $region34: #{tpu_custom_call.1} parent=5 // pred_check_branch
        %210 = sbr.rel (%p207) target = $region36
      $region35: #{tpu_custom_call.1} parent=5 // pred_region
        %s211 = ssub.s32 %s17, 1
        %s212 = sand.u32 %s42, 1
        %s213 = scalar_lea.sflag [#allocation7], %s212
        %s214 = sand.u32 %s42, 1
        %s215 = smul.addr %s214, 128
        %s216 = scalar_lea.vmem [#allocation6], %s215
        // Predicated region
        $region37: #{tpu_custom_call.1} parent=35 // pred_check
          %p217 = pneg %p55
        $region38: #{tpu_custom_call.1} parent=35 // pred_check_branch
          %219 = sbr.rel (%p217) target = $region40
        $region39: #{tpu_custom_call.1} parent=35 // pred_region
          %220 = dma.done %s213, 2048
        $region40: #{tpu_custom_call.1} parent=35 // pred_fallthru
          _
        // Predicated region
        $region41: #{tpu_custom_call.1} parent=35 // pred_check
          %p221 = pneg %p76
        $region42: #{tpu_custom_call.1} parent=35 // pred_check_branch
          %223 = sbr.rel (%p221) target = $region44
        $region43: #{tpu_custom_call.1} parent=35 // pred_region
          %224 = dma.done [#allocation10], 2048
        $region44: #{tpu_custom_call.1} parent=35 // pred_fallthru
          _
        %s225 = sand.u32 %s42, 1
        %s226 = scalar_lea.sflag [#allocation7], %s225
        %s227 = sand.u32 %s42, 1
        %s228 = smul.addr %s227, 128
        %s229 = scalar_lea.vmem [#allocation6], %s228
        %p230 = pneg %p55
        %p231 = pneg %p52
        %p232 = pneg %p76
        %p233 = pneg %p73
        %p234 = pneg %p97
        %p235 = pneg %p94
        %p236 = pneg %p118
        %p237 = pneg %p115
        %p238 = pneg %p146
        %p239 = pneg %p143
        %s240 = sand.u32 %s133, 1
        %s241 = scalar_lea.sflag [#allocation8], %s240
        %s242 = sand.u32 %s133, 1
        %s243 = smul.addr %s242, 128
        %s244 = scalar_lea.vmem [#allocation11], %s243
        %s245 = smul.u32 16, %s27
        %s246 = smul.u32 %s27, %s26
        %s247 = smul.u32 16, %s246
        %v248 = vld [vmem:[%s216] sm:$0xff]
        %v249 = vld [vmem:[%s216 + $0x8] sm:$0xff]
        %v250 = vld [vmem:[%s216 + $0x10] sm:$0xff]
        %v251 = vld [vmem:[%s216 + $0x18] sm:$0xff]
        %v252 = vld [vmem:[%s216 + $0x20] sm:$0xff]
        %v253 = vld [vmem:[%s216 + $0x28] sm:$0xff]
        %v254 = vld [vmem:[%s216 + $0x30] sm:$0xff]
        %v255 = vld [vmem:[%s216 + $0x38] sm:$0xff]
        %v256 = vld [vmem:[%s216 + $0x40] sm:$0xff]
        %v257 = vld [vmem:[%s216 + $0x48] sm:$0xff]
        %v258 = vld [vmem:[%s216 + $0x50] sm:$0xff]
        %v259 = vld [vmem:[%s216 + $0x58] sm:$0xff]
        %v260 = vld [vmem:[%s216 + $0x60] sm:$0xff]
        %v261 = vld [vmem:[%s216 + $0x68] sm:$0xff]
        %v262 = vld [vmem:[%s216 + $0x70] sm:$0xff]
        %v263 = vld [vmem:[%s216 + $0x78] sm:$0xff]
        %v264 = vld [vmem:[#allocation9] sm:$0xff]
        %v265 = vld [vmem:[#allocation9 + $0x8] sm:$0xff]
        %v266 = vld [vmem:[#allocation9 + $0x10] sm:$0xff]
        %v267 = vld [vmem:[#allocation9 + $0x18] sm:$0xff]
        %v268 = vld [vmem:[#allocation9 + $0x20] sm:$0xff]
        %v269 = vld [vmem:[#allocation9 + $0x28] sm:$0xff]
        %v270 = vld [vmem:[#allocation9 + $0x30] sm:$0xff]
        %v271 = vld [vmem:[#allocation9 + $0x38] sm:$0xff]
        %v272 = vld [vmem:[#allocation9 + $0x40] sm:$0xff]
        %v273 = vld [vmem:[#allocation9 + $0x48] sm:$0xff]
        %v274 = vld [vmem:[#allocation9 + $0x50] sm:$0xff]
        %v275 = vld [vmem:[#allocation9 + $0x58] sm:$0xff]
        %v276 = vld [vmem:[#allocation9 + $0x60] sm:$0xff]
        %v277 = vld [vmem:[#allocation9 + $0x68] sm:$0xff]
        %v278 = vld [vmem:[#allocation9 + $0x70] sm:$0xff]
        %v279 = vld [vmem:[#allocation9 + $0x78] sm:$0xff]
        %280 = vmatprep.subr.mxu0 0.0
        %281 = vmatpush1.msra.mxu0 %v279
        %282 = vmatprep.subr.mxu0 0.0
        %283 = vmatpush1.msra.mxu0 %v278
        %284 = vmatprep.subr.mxu0 0.0
        %285 = vmatpush1.msra.mxu0 %v277
        %286 = vmatprep.subr.mxu0 0.0
        %287 = vmatpush1.msra.mxu0 %v276
        %288 = vmatprep.subr.mxu0 0.0
        %289 = vmatpush1.msra.mxu0 %v275
        %290 = vmatprep.subr.mxu0 0.0
        %291 = vmatpush1.msra.mxu0 %v274
        %292 = vmatprep.subr.mxu0 0.0
        %293 = vmatpush1.msra.mxu0 %v273
        %294 = vmatprep.subr.mxu0 0.0
        %295 = vmatpush1.msra.mxu0 %v272
        %296 = vmatprep.subr.mxu0 0.0
        %297 = vmatpush1.msra.mxu0 %v271
        %298 = vmatprep.subr.mxu0 0.0
        %299 = vmatpush1.msra.mxu0 %v270
        %300 = vmatprep.subr.mxu0 0.0
        %301 = vmatpush1.msra.mxu0 %v269
        %302 = vmatprep.subr.mxu0 0.0
        %303 = vmatpush1.msra.mxu0 %v268
        %304 = vmatprep.subr.mxu0 0.0
        %305 = vmatpush1.msra.mxu0 %v267
        %306 = vmatprep.subr.mxu0 0.0
        %307 = vmatpush1.msra.mxu0 %v266
        %308 = vmatprep.subr.mxu0 0.0
        %309 = vmatpush1.msra.mxu0 %v265
        %310 = vmatprep.subr.mxu0 0.0
        %311 = vmatpush1.msra.mxu0 %v264
        %312 = vmatprep.subr.mxu0 0.0
        %313 = vmatpush2.msra.mxu0 0.0
        %314 = vmatprep.subr.mxu0 0.0
        %315 = vmatpush2.msra.mxu0 0.0
        %316 = vmatprep.subr.mxu0 0.0
        %317 = vmatpush2.msra.mxu0 0.0
        %318 = vmatprep.subr.mxu0 0.0
        %319 = vmatpush2.msra.mxu0 0.0
        %320 = vmatprep.subr.mxu0 0.0
        %321 = vmatpush2.msra.mxu0 0.0
        %322 = vmatprep.subr.mxu0 0.0
        %323 = vmatpush2.msra.mxu0 0.0
        %324 = vmatprep.subr.mxu0 0.0
        %325 = vmatpush2.msra.mxu0 0.0
        %326 = vmatprep.subr.mxu0 0.0
        %327 = vmatpush2.msra.mxu0 0.0
        %328 = vmatprep.subr.mxu0 0.0
        %329 = vmatpush2.msra.mxu0 0.0
        %330 = vmatprep.subr.mxu0 0.0
        %331 = vmatpush2.msra.mxu0 0.0
        %332 = vmatprep.subr.mxu0 0.0
        %333 = vmatpush2.msra.mxu0 0.0
        %334 = vmatprep.subr.mxu0 0.0
        %335 = vmatpush2.msra.mxu0 0.0
        %336 = vmatprep.subr.mxu0 0.0
        %337 = vmatpush2.msra.mxu0 0.0
        %338 = vmatprep.subr.mxu0 0.0
        %339 = vmatpush2.msra.mxu0 0.0
        %340 = vmatprep.subr.mxu0 0.0
        %341 = vmatpush2.msra.mxu0 0.0
        %342 = vmatprep.subr.mxu0 0.0
        %343 = vmatpush2.msra.mxu0 0.0
        %344 = vmatprep.mubr.f32.mxu0 0.0
        %345 = vmatmul.mubr.f32.gmra.mxu0 %v248
        %v346 = vpop.f32.mrf.mxu0
        %v347 = vadd.f32 0.0, %v346
        %v348 = vpop.f32.mrf.mxu0
        %349 = vmatprep.mubr.f32.mxu0 0.0
        %350 = vmatmul.mubr.f32.gmra.mxu0 %v249
        %v351 = vpop.f32.mrf.mxu0
        %v352 = vadd.f32 0.0, %v351
        %v353 = vpop.f32.mrf.mxu0
        %354 = vmatprep.mubr.f32.mxu0 0.0
        %355 = vmatmul.mubr.f32.gmra.mxu0 %v250
        %v356 = vpop.f32.mrf.mxu0
        %v357 = vadd.f32 0.0, %v356
        %v358 = vpop.f32.mrf.mxu0
        %359 = vmatprep.mubr.f32.mxu0 0.0
        %360 = vmatmul.mubr.f32.gmra.mxu0 %v251
        %v361 = vpop.f32.mrf.mxu0
        %v362 = vadd.f32 0.0, %v361
        %v363 = vpop.f32.mrf.mxu0
        %364 = vmatprep.mubr.f32.mxu0 0.0
        %365 = vmatmul.mubr.f32.gmra.mxu0 %v252
        %v366 = vpop.f32.mrf.mxu0
        %v367 = vadd.f32 0.0, %v366
        %v368 = vpop.f32.mrf.mxu0
        %369 = vmatprep.mubr.f32.mxu0 0.0
        %370 = vmatmul.mubr.f32.gmra.mxu0 %v253
        %v371 = vpop.f32.mrf.mxu0
        %v372 = vadd.f32 0.0, %v371
        %v373 = vpop.f32.mrf.mxu0
        %374 = vmatprep.mubr.f32.mxu0 0.0
        %375 = vmatmul.mubr.f32.gmra.mxu0 %v254
        %v376 = vpop.f32.mrf.mxu0
        %v377 = vadd.f32 0.0, %v376
        %v378 = vpop.f32.mrf.mxu0
        %379 = vmatprep.mubr.f32.mxu0 0.0
        %380 = vmatmul.mubr.f32.gmra.mxu0 %v255
        %v381 = vpop.f32.mrf.mxu0
        %v382 = vadd.f32 0.0, %v381
        %v383 = vpop.f32.mrf.mxu0
        %384 = vmatprep.mubr.f32.mxu0 0.0
        %385 = vmatmul.mubr.f32.gmra.mxu0 %v256
        %v386 = vpop.f32.mrf.mxu0
        %v387 = vadd.f32 0.0, %v386
        %v388 = vpop.f32.mrf.mxu0
        %389 = vmatprep.mubr.f32.mxu0 0.0
        %390 = vmatmul.mubr.f32.gmra.mxu0 %v257
        %v391 = vpop.f32.mrf.mxu0
        %v392 = vadd.f32 0.0, %v391
        %v393 = vpop.f32.mrf.mxu0
        %394 = vmatprep.mubr.f32.mxu0 0.0
        %395 = vmatmul.mubr.f32.gmra.mxu0 %v258
        %v396 = vpop.f32.mrf.mxu0
        %v397 = vadd.f32 0.0, %v396
        %v398 = vpop.f32.mrf.mxu0
        %399 = vmatprep.mubr.f32.mxu0 0.0
        %400 = vmatmul.mubr.f32.gmra.mxu0 %v259
        %v401 = vpop.f32.mrf.mxu0
        %v402 = vadd.f32 0.0, %v401
        %v403 = vpop.f32.mrf.mxu0
        %404 = vmatprep.mubr.f32.mxu0 0.0
        %405 = vmatmul.mubr.f32.gmra.mxu0 %v260
        %v406 = vpop.f32.mrf.mxu0
        %v407 = vadd.f32 0.0, %v406
        %v408 = vpop.f32.mrf.mxu0
        %409 = vmatprep.mubr.f32.mxu0 0.0
        %410 = vmatmul.mubr.f32.gmra.mxu0 %v261
        %v411 = vpop.f32.mrf.mxu0
        %v412 = vadd.f32 0.0, %v411
        %v413 = vpop.f32.mrf.mxu0
        %414 = vmatprep.mubr.f32.mxu0 0.0
        %415 = vmatmul.mubr.f32.gmra.mxu0 %v262
        %v416 = vpop.f32.mrf.mxu0
        %v417 = vadd.f32 0.0, %v416
        %v418 = vpop.f32.mrf.mxu0
        %419 = vmatprep.mubr.f32.mxu0 0.0
        %420 = vmatmul.mubr.f32.gmra.mxu0 %v263
        %v421 = vpop.f32.mrf.mxu0
        %v422 = vadd.f32 0.0, %v421
        %v423 = vpop.f32.mrf.mxu0
        %424 = vdwg.mxu0
        %p425 = scmp.eq.s32.totalorder %s26, 0
        // Predicated region
        $region45: #{tpu_custom_call.1} parent=35 // pred_check
          %p426 = pneg %p425
        $region46: #{tpu_custom_call.1} parent=35 // pred_check_branch
          %428 = sbr.rel (%p426) target = $region48
        $region47: #{tpu_custom_call.1} parent=35 // pred_region
          %p429 = scmp.eq.s32.totalorder %s27, 0
          // Predicated region
          $region49: #{tpu_custom_call.1} parent=47 // pred_check
            %p430 = pneg %p429
          $region50: #{tpu_custom_call.1} parent=47 // pred_check_branch
            %432 = sbr.rel (%p430) target = $region52
          $region51: #{tpu_custom_call.1} parent=47 // pred_region
            %433 = vst [vmem:[#allocation2] sm:$0x1] 0.0
            %434 = vst [vmem:[#allocation3] sm:$0x1] 0.0
          $region52: #{tpu_custom_call.1} parent=47 // pred_fallthru
            _
          %v435 = vld [vmem:[#allocation2] sm:$0x1]
          %v436 = vadd.f32 %v347, %v352
          %v437 = vadd.f32 %v436, %v357
          %v438 = vadd.f32 %v437, %v362
          %v439 = vadd.f32 %v438, %v367
          %v440 = vadd.f32 %v439, %v372
          %v441 = vadd.f32 %v440, %v377
          %v442 = vadd.f32 %v441, %v382
          %v443 = vadd.f32 %v442, %v387
          %v444 = vadd.f32 %v443, %v392
          %v445 = vadd.f32 %v444, %v397
          %v446 = vadd.f32 %v445, %v402
          %v447 = vadd.f32 %v446, %v407
          %v448 = vadd.f32 %v447, %v412
          %v449 = vadd.f32 %v448, %v417
          %v450 = vadd.f32 %v449, %v422
          %v451 = vrot.slane %v450, 4
          %v452 = vadd.f32 %v450, %v451
          %v453 = vrot.slane %v452, 2
          %v454 = vadd.f32 %v452, %v453
          %v455 = vrot.slane %v454, 1
          %v456 = vadd.f32 %v454, %v455
          %v457 = vadd.f32 %v435, %v456
          %458 = vst [vmem:[#allocation2] sm:$0x1] %v457
          %v459 = vld [vmem:[#allocation3] sm:$0x1]
          %v460 = vmul.f32 %v347, %v347
          %v461 = vmul.f32 %v352, %v352
          %v462 = vmul.f32 %v357, %v357
          %v463 = vmul.f32 %v362, %v362
          %v464 = vmul.f32 %v367, %v367
          %v465 = vmul.f32 %v372, %v372
          %v466 = vmul.f32 %v377, %v377
          %v467 = vmul.f32 %v382, %v382
          %v468 = vmul.f32 %v387, %v387
          %v469 = vmul.f32 %v392, %v392
          %v470 = vmul.f32 %v397, %v397
          %v471 = vmul.f32 %v402, %v402
          %v472 = vmul.f32 %v407, %v407
          %v473 = vmul.f32 %v412, %v412
          %v474 = vmul.f32 %v417, %v417
          %v475 = vmul.f32 %v422, %v422
          %v476 = vadd.f32 %v460, %v461
          %v477 = vadd.f32 %v476, %v462
          %v478 = vadd.f32 %v477, %v463
          %v479 = vadd.f32 %v478, %v464
          %v480 = vadd.f32 %v479, %v465
          %v481 = vadd.f32 %v480, %v466
          %v482 = vadd.f32 %v481, %v467
          %v483 = vadd.f32 %v482, %v468
          %v484 = vadd.f32 %v483, %v469
          %v485 = vadd.f32 %v484, %v470
          %v486 = vadd.f32 %v485, %v471
          %v487 = vadd.f32 %v486, %v472
          %v488 = vadd.f32 %v487, %v473
          %v489 = vadd.f32 %v488, %v474
          %v490 = vadd.f32 %v489, %v475
          %v491 = vrot.slane %v490, 4
          %v492 = vadd.f32 %v490, %v491
          %v493 = vrot.slane %v492, 2
          %v494 = vadd.f32 %v492, %v493
          %v495 = vrot.slane %v494, 1
          %v496 = vadd.f32 %v494, %v495
          %v497 = vadd.f32 %v459, %v496
          %498 = vst [vmem:[#allocation3] sm:$0x1] %v497
        $region48: #{tpu_custom_call.1} parent=35 // pred_fallthru
          _
        %p499 = scmp.eq.s32.totalorder %s26, 1
        // Predicated region
        $region53: #{tpu_custom_call.1} parent=35 // pred_check
          %p500 = pneg %p499
        $region54: #{tpu_custom_call.1} parent=35 // pred_check_branch
          %502 = sbr.rel (%p500) target = $region56
        $region55: #{tpu_custom_call.1} parent=35 // pred_region
          %p503 = scmp.eq.s32.totalorder %s27, 0
          // Predicated region
          $region57: #{tpu_custom_call.1} parent=55 // pred_check
            %p504 = pneg %p503
          $region58: #{tpu_custom_call.1} parent=55 // pred_check_branch
            %506 = sbr.rel (%p504) target = $region60
          $region59: #{tpu_custom_call.1} parent=55 // pred_region
            %v507 = vld [vmem:[#allocation2] sm:$0x1]
            %v508 = vmul.f32 %v507, 0.001953125
            %v509 = vld [vmem:[#allocation3] sm:$0x1]
            %v510 = vmul.f32 %v509, 0.001953125
            %v511 = vmul.f32 %v508, %v508
            %v512 = vsub.f32 %v510, %v511
            %v513 = vmax.f32 %v512, 0.0
            %v514 = vld [vmem:[%s2] sm:$0x1]
            %v515 = vadd.f32 %v513, 1e-05
            %v516 = vrsqrt.pop %v515
            %v517 = vmul.f32 %v514, %v516
            %518 = vst [vmem:[#allocation4] sm:$0x1] %v517
            %v519 = vld [vmem:[%s3] sm:$0x1]
            %v520 = vmul.f32 %v508, %v517
            %v521 = vsub.f32 %v519, %v520
            %522 = vst [vmem:[#allocation5] sm:$0x1] %v521
          $region60: #{tpu_custom_call.1} parent=55 // pred_fallthru
            _
          %v523 = vld [vmem:[#allocation4] sm:$0x1]
          %v525 = vlaneseq
          %v526 = vshrl.u32 %v525, 7
          %v527 = vsub.s32 0, %v526
          %v528 = vrot.slane %v523, %v527
          %v530 = vmul.f32 %v347, %v528
          %v531 = vmul.f32 %v352, %v528
          %v532 = vmul.f32 %v357, %v528
          %v533 = vmul.f32 %v362, %v528
          %v534 = vmul.f32 %v367, %v528
          %v535 = vmul.f32 %v372, %v528
          %v536 = vmul.f32 %v377, %v528
          %v537 = vmul.f32 %v382, %v528
          %v538 = vmul.f32 %v387, %v528
          %v539 = vmul.f32 %v392, %v528
          %v540 = vmul.f32 %v397, %v528
          %v541 = vmul.f32 %v402, %v528
          %v542 = vmul.f32 %v407, %v528
          %v543 = vmul.f32 %v412, %v528
          %v544 = vmul.f32 %v417, %v528
          %v545 = vmul.f32 %v422, %v528
          %v546 = vld [vmem:[#allocation5] sm:$0x1]
          %v548 = vlaneseq
          %v549 = vshrl.u32 %v548, 7
          %v550 = vsub.s32 0, %v549
          %v551 = vrot.slane %v546, %v550
          %v553 = vadd.f32 %v530, %v551
          %v554 = vadd.f32 %v531, %v551
          %v555 = vadd.f32 %v532, %v551
          %v556 = vadd.f32 %v533, %v551
          %v557 = vadd.f32 %v534, %v551
          %v558 = vadd.f32 %v535, %v551
          %v559 = vadd.f32 %v536, %v551
          %v560 = vadd.f32 %v537, %v551
          %v561 = vadd.f32 %v538, %v551
          %v562 = vadd.f32 %v539, %v551
          %v563 = vadd.f32 %v540, %v551
          %v564 = vadd.f32 %v541, %v551
          %v565 = vadd.f32 %v542, %v551
          %v566 = vadd.f32 %v543, %v551
          %v567 = vadd.f32 %v544, %v551
          %v568 = vadd.f32 %v545, %v551
          %v569 = vmax.f32 %v553, 0.0
          %v570 = vmax.f32 %v554, 0.0
          %v571 = vmax.f32 %v555, 0.0
          %v572 = vmax.f32 %v556, 0.0
          %v573 = vmax.f32 %v557, 0.0
          %v574 = vmax.f32 %v558, 0.0
          %v575 = vmax.f32 %v559, 0.0
          %v576 = vmax.f32 %v560, 0.0
          %v577 = vmax.f32 %v561, 0.0
          %v578 = vmax.f32 %v562, 0.0
          %v579 = vmax.f32 %v563, 0.0
          %v580 = vmax.f32 %v564, 0.0
          %v581 = vmax.f32 %v565, 0.0
          %v582 = vmax.f32 %v566, 0.0
          %v583 = vmax.f32 %v567, 0.0
          %v584 = vmax.f32 %v568, 0.0
          %585 = vst [vmem:[%s244] sm:$0xff] %v569
          %586 = vst [vmem:[%s244 + $0x8] sm:$0xff] %v570
          %587 = vst [vmem:[%s244 + $0x10] sm:$0xff] %v571
          %588 = vst [vmem:[%s244 + $0x18] sm:$0xff] %v572
          %589 = vst [vmem:[%s244 + $0x20] sm:$0xff] %v573
          %590 = vst [vmem:[%s244 + $0x28] sm:$0xff] %v574
          %591 = vst [vmem:[%s244 + $0x30] sm:$0xff] %v575
          %592 = vst [vmem:[%s244 + $0x38] sm:$0xff] %v576
          %593 = vst [vmem:[%s244 + $0x40] sm:$0xff] %v577
          %594 = vst [vmem:[%s244 + $0x48] sm:$0xff] %v578
          %595 = vst [vmem:[%s244 + $0x50] sm:$0xff] %v579
          %596 = vst [vmem:[%s244 + $0x58] sm:$0xff] %v580
          %597 = vst [vmem:[%s244 + $0x60] sm:$0xff] %v581
          %598 = vst [vmem:[%s244 + $0x68] sm:$0xff] %v582
          %599 = vst [vmem:[%s244 + $0x70] sm:$0xff] %v583
          %600 = vst [vmem:[%s244 + $0x78] sm:$0xff] %v584
        $region56: #{tpu_custom_call.1} parent=35 // pred_fallthru
          _
        %s601 = sand.u32 %s133, 1
        %s602 = scalar_lea.sflag [#allocation8], %s601
        %s603 = sand.u32 %s133, 1
        %s604 = smul.addr %s603, 128
        %s605 = scalar_lea.vmem [#allocation11], %s604
        // Predicated region
        $region61: #{tpu_custom_call.1} parent=35 // pred_check
          %p606 = pneg %p143
        $region62: #{tpu_custom_call.1} parent=35 // pred_check_branch
          %608 = sbr.rel (%p606) target = $region64
        $region63: #{tpu_custom_call.1} parent=35 // pred_region
          %s609 = smul.u32 %s27, %s26
          %s610 = smul.u32 16, %s609
          %s612 = ssub.s32 2048, 2048
          %613 = vsyncadd %s602, %s612
          %s614 = smul.addr %s610, 128
          %s615 = scalar_lea.hbm %s4, %s614
          %s616 = sshll.u32 %s605, 4
          %s617 = int_to_ptr.vmem [resolvable:$true] %s616
          %622 = dma.vmem_to_hbm [thread:$0]  %s617, 2048, %s615, %s602, 128, 128, 8
        $region64: #{tpu_custom_call.1} parent=35 // pred_fallthru
          _
      $region36: #{tpu_custom_call.1} parent=5 // pred_fallthru
        _
      %p623 = scmp.le.s32.totalorder 2, %s17
      // Predicated region
      $region65: #{tpu_custom_call.1} parent=5 // pred_check
        %p624 = pneg %p623
      $region66: #{tpu_custom_call.1} parent=5 // pred_check_branch
        %626 = sbr.rel (%p624) target = $region68
      $region67: #{tpu_custom_call.1} parent=5 // pred_region
        %s627 = ssub.s32 %s17, 2
        // Predicated region
        $region69: #{tpu_custom_call.1} parent=67 // pred_check
          %p628 = pneg %p149
        $region70: #{tpu_custom_call.1} parent=67 // pred_check_branch
          %630 = sbr.rel (%p628) target = $region72
        $region71: #{tpu_custom_call.1} parent=67 // pred_region
          %s631 = sand.u32 %s134, 1
          %s632 = scalar_lea.sflag [#allocation8], %s631
          %s633 = sand.u32 %s134, 1
          %s634 = smul.addr %s633, 128
          %s635 = scalar_lea.vmem [#allocation11], %s634
          %636 = dma.done %s632, 2048
        $region72: #{tpu_custom_call.1} parent=67 // pred_fallthru
          _
      $region68: #{tpu_custom_call.1} parent=5 // pred_fallthru
        _
    $region6: #{tpu_custom_call.1} parent=1 // loop_footer
      %s21 = sadd.s32 1, %s17
    $region7: #{tpu_custom_call.1} parent=1 // loop_footer_branch
      %16 = sbr.rel target = $region3
    $region8: #{tpu_custom_call.1} parent=1 // loop_exit
      _
    %637 = vsyncpa [#allocation7], 1
    %s638 = scalar_lea.sflag [#allocation7], 1
    %639 = vsyncpa %s638, 1
    %640 = vsyncpa [#allocation10], 1
    %641 = vsyncpa [#allocation8], 1
    %s642 = scalar_lea.sflag [#allocation8], 1
    %643 = vsyncpa %s642, 1

</llo_original>
